<compile_context>
chip_gen: v5e
topology: v5e:2x2
jax: 0.10.0
libtpu: 0.0.40
codegen_flags: <defaults>
</compile_context>

<pallas_src>
import functools

import jax
import jax.numpy as jnp
from jax.experimental import pallas as pl
from jax.experimental.pallas import tpu as pltpu

LR = jnp.asarray([1e-06, 1e-05, 1e-4, 1e-3, 1e-2, 1e-1, 1.0], jnp.float32)
NORM_CLIP = 10.0     # clip_grad_norm runs on grads that are zeroed before backward -> no-op
VALUE_CLIP = 10000.0

_MiB = 1024 * 1024


def _vmem_limit_bytes():
    """Scoped-VMEM limit to request, derived from the chip's physical VMEM."""
    cap = None
    try:
        cap = int(pltpu.get_tpu_info().vmem_capacity_bytes)
    except Exception:
        cap = None
    if cap is None:
        kind = ""
        try:
            kind = jax.devices()[0].device_kind.lower()
        except Exception:
            pass
        if "v7" in kind or "7x" in kind:
            cap = 64 * _MiB            # v7x: 64 MiB VMEM per TensorCore
        elif any(t in kind for t in ("v4", "v5", "v6")):
            cap = 128 * _MiB           # v4/v5e/v6e: 128 MiB
        else:
            cap = 64 * _MiB            # unknown: be conservative
    # Leave headroom below physical VMEM for compiler scratch / kernel internals.
    return int(max(32 * _MiB, min(cap - 16 * _MiB, 100 * _MiB)))


def _pick_batch_block(B, D, vmem_limit, *, symmetric, target_min_steps=8):
    """Pick the per-step batch tile TB and number of grid steps, sized against VMEM.

    Honest per-batch-element footprint (all f32):
      * H tile: D*D*4 bytes, double-buffered (x2) plus the loaded value / (TB,D,D)
        product temporary of the VPU matvec (x1 symmetric, x2 general).
      * small blocks/temps: the (2,D) xg block, the (3,D) state block and the in-kernel
        xc/grad/hx/f rows each pad to an (8, roundup(D,128)) VMEM tile -> ~12 such rows.
    Only ~60% of the requested scoped-VMEM limit is given to block data; the rest is
    headroom for compiler scratch.
    """
    lanes = max(128, -(-D // 128) * 128)
    h_bytes = D * D * 4
    row_bytes = 8 * lanes * 4
    h_factor = 4 if symmetric else 5          # 2 buffers + value/product temps
    per_elem = h_factor * h_bytes + 12 * row_bytes
    budget = int(vmem_limit * 0.6)
    cap = max(1, budget // per_elem)
    # TODO(synk): if a single batch element's H exceeds the budget (very large D), the
    # H matrix itself would need D-tiling; not needed for this environment's sizes.
    tb = max(1, min(B, cap))
    # Keep >= target_min_steps grid steps when possible so the DMA pipeline overlaps
    # and v7x can shard the parallel batch axis over both TensorCores.
    tb = max(1, min(tb, -(-B // target_min_steps)))
    nsteps = -(-B // tb)
    tb = -(-B // nsteps)                      # rebalance: padding < nsteps elements
    return tb, nsteps


def _quad_eval_kernel(h_ref, xg_ref, state_ref, *, symmetric):
    # Block views: h (TB, D, D); xg (TB, 2, D) rows = [x, g]; state (TB, 3, D).
    tb, _, d = h_ref.shape

    h = h_ref[...]                       # (TB, D, D)  -- the HBM-bound stream
    xg = xg_ref[...]                     # (TB, 2, D)
    x = xg[:, 0, :]                      # (TB, D)
    g = xg[:, 1, :]                      # (TB, D)

    # p.data.clamp_ on the only trainable param (x).
    xc = jnp.clip(x, -VALUE_CLIP, VALUE_CLIP)

    # hx[b, i] = sum_j H[b, i, j] * xc[b, j]   (VPU multiply + lane-axis reduce; exact f32)
    hx = jnp.sum(h * xc[:, None, :], axis=2)

    if symmetric:
        # Environment guarantees H = A A^T / (10 D) + 0.1 I  =>  0.5*(H + H^T)x == Hx.
        grad = hx + g
    else:
        # htx[b, i] = sum_j H[b, j, i] * xc[b, j]  (sublane-axis reduce, no H^T copy)
        htx = jnp.sum(h * xc[:, :, None], axis=1)
        grad = 0.5 * (hx + htx) + g

    # f_b = 0.5 * x^T H x + g^T x
    f = 0.5 * jnp.sum(xc * hx, axis=-1) + jnp.sum(g * xc, axis=-1)   # (TB,)

    # Fused, lane-dense state rows: [x | grad | f broadcast across the row].
    state_ref[:, 0:1, :] = xc[:, None, :].astype(state_ref.dtype)
    state_ref[:, 1:2, :] = grad[:, None, :].astype(state_ref.dtype)
    state_ref[:, 2:3, :] = jnp.broadcast_to(
        f[:, None, None], (tb, 1, d)).astype(state_ref.dtype)


def quadratic_env_eval(H, g, x, *, assume_symmetric_h=True):
    """H: (B, D, D) f32; g: (B, D) f32; x: (B, D) f32.

    Returns (state, func_val) where state is (B, 2*D + 1) =
    [clamped x | grad of f wrt x | f], func_val is (B,).

    assume_symmetric_h=True matches the environment's PSD construction of H (single
    matvec). NOTE: it silently computes grad = Hx + g and is only correct while H is
    symmetric; set False for arbitrary (possibly non-symmetric) H.
    """
    B, D, _ = H.shape
    H = jnp.asarray(H, jnp.float32)
    xg = jnp.stack([jnp.asarray(x, jnp.float32).reshape(B, D),
                    jnp.asarray(g, jnp.float32).reshape(B, D)], axis=1)   # (B, 2, D)

    vmem_limit = _vmem_limit_bytes()
    tb, nsteps = _pick_batch_block(B, D, vmem_limit, symmetric=assume_symmetric_h)
    B_pad = tb * nsteps
    if B_pad != B:
        H = jnp.pad(H, ((0, B_pad - B), (0, 0), (0, 0)))
        xg = jnp.pad(xg, ((0, B_pad - B), (0, 0), (0, 0)))

    kernel = functools.partial(_quad_eval_kernel, symmetric=assume_symmetric_h)

    state3 = pl.pallas_call(
        kernel,
        out_shape=jax.ShapeDtypeStruct((B_pad, 3, D), jnp.float32),
        grid_spec=pltpu.PrefetchScalarGridSpec(
            num_scalar_prefetch=0,
            grid=(nsteps,),
            in_specs=[
                pl.BlockSpec((tb, D, D), lambda b: (b, 0, 0)),   # H block
                pl.BlockSpec((tb, 2, D), lambda b: (b, 0, 0)),   # packed [x, g] block
            ],
            out_specs=pl.BlockSpec((tb, 3, D), lambda b: (b, 0, 0)),
        ),
        compiler_params=pltpu.CompilerParams(
            dimension_semantics=("parallel",),
            vmem_limit_bytes=vmem_limit,
        ),
    )(H, xg)

    # Lane-dense (B, 3, D) -> (B, 3D) -> [x | grad | f] = first 2D+1 columns.
    state = state3.reshape(B_pad, 3 * D)[:B, : 2 * D + 1]
    fval = state3[:B, 2, 0]
    return state, fval


def _reference_eval(H, g, x):
    xc = jnp.clip(x, -VALUE_CLIP, VALUE_CLIP)
    hx = jnp.einsum("bij,bj->bi", H, xc)
    htx = jnp.einsum("bji,bj->bi", H, xc)
    f = 0.5 * jnp.einsum("bi,bi->b", xc, hx) + jnp.einsum("bi,bi->b", g, xc)
    grad = 0.5 * (hx + htx) + g
    state = jnp.concatenate([xc, grad, f[:, None]], axis=1)
    return state, f


if __name__ == "__main__":
    batch_size, dimension = 2, 16

    key = jax.random.PRNGKey(0)
    kA, kg, kx = jax.random.split(key, 3)

    # __init__: H_b = A A^T / (D*10) + 0.1 I  (symmetric PSD), g ~ U[0,1)
    A = jax.random.uniform(kA, (batch_size, dimension, dimension), jnp.float32)
    H = jnp.einsum("bij,bkj->bik", A, A) / (dimension * 10.0) \
        + 0.1 * jnp.eye(dimension, dtype=jnp.float32)
    g = jax.random.uniform(kg, (batch_size, dimension), jnp.float32)

    # reset(): x ~ N(0, 1)
    x = jax.random.normal(kx, (batch_size, dimension), jnp.float32)

    ref_state, ref_fval = _reference_eval(H, g, x)

    # Symmetric fast path (matches the environment's H construction).
    state, fval = quadratic_env_eval(H, g, x, assume_symmetric_h=True)
    state = jax.block_until_ready(state)
    fval = jax.block_until_ready(fval)
    assert state.shape == (batch_size, 2 * dimension + 1)
    assert fval.shape == (batch_size,)
    assert jnp.allclose(state, ref_state, rtol=1e-5, atol=1e-5)
    assert jnp.allclose(fval, ref_fval, rtol=1e-5, atol=1e-5)

    # General path (no symmetry assumption) must also match.
    state_g, fval_g = quadratic_env_eval(H, g, x, assume_symmetric_h=False)
    state_g = jax.block_until_ready(state_g)
    fval_g = jax.block_until_ready(fval_g)
    assert jnp.allclose(state_g, ref_state, rtol=1e-5, atol=1e-5)
    assert jnp.allclose(fval_g, ref_fval, rtol=1e-5, atol=1e-5)

    print("KERNEL_OK")
</pallas_src>

<mosaic_0001>
module attributes {stable_mosaic.version = 11 : i64} {
  func.func @_quad_eval_kernel(%arg0: i32, %arg1: memref<1x16x16xf32, #tpu.memory_space<vmem>>, %arg2: memref<1x2x16xf32, #tpu.memory_space<vmem>>, %arg3: memref<1x3x16xf32, #tpu.memory_space<vmem>>) attributes {dimension_semantics = [#tpu.dimension_semantics<parallel>], iteration_bounds = array<i64: 2>, scalar_prefetch = 0 : i64, scratch_operands = 0 : i64, tpu.core_type = #tpu.core_type<tc>, window_params = [{transform_indices = @transform_0, window_bounds = array<i64: 1, 16, 16>}, {transform_indices = @transform_1, window_bounds = array<i64: 1, 2, 16>}, {transform_indices = @transform_2, window_bounds = array<i64: 1, 3, 16>}]} {
    %c0 = arith.constant 0 : index
    %c0_0 = arith.constant 0 : index
    %c0_1 = arith.constant 0 : index
    %0 = vector.load %arg1[%c0, %c0_0, %c0_1] : memref<1x16x16xf32, #tpu.memory_space<vmem>>, vector<1x16x16xf32>
    %c0_2 = arith.constant 0 : index
    %c0_3 = arith.constant 0 : index
    %c0_4 = arith.constant 0 : index
    %1 = vector.load %arg2[%c0_2, %c0_3, %c0_4] : memref<1x2x16xf32, #tpu.memory_space<vmem>>, vector<1x2x16xf32>
    %2 = vector.extract_strided_slice %1 {offsets = [0, 0, 0], sizes = [1, 1, 16], strides = [1, 1, 1]} : vector<1x2x16xf32> to vector<1x1x16xf32>
    %3 = vector.shape_cast %2 : vector<1x1x16xf32> to vector<1x16xf32>
    %4 = vector.extract_strided_slice %1 {offsets = [0, 1, 0], sizes = [1, 1, 16], strides = [1, 1, 1]} : vector<1x2x16xf32> to vector<1x1x16xf32>
    %5 = vector.shape_cast %4 : vector<1x1x16xf32> to vector<1x16xf32>
    %cst = arith.constant -1.000000e+04 : f32
    %cst_5 = arith.constant 1.000000e+04 : f32
    %6 = vector.broadcast %cst : f32 to vector<1x16xf32>
    %7 = arith.maximumf %6, %3 : vector<1x16xf32>
    %8 = vector.broadcast %cst_5 : f32 to vector<1x16xf32>
    %9 = arith.minimumf %8, %7 : vector<1x16xf32>
    %10 = vector.shape_cast %9 : vector<1x16xf32> to vector<1x1x16xf32>
    %11 = vector.broadcast %10 : vector<1x1x16xf32> to vector<1x16x16xf32>
    %12 = arith.mulf %0, %11 : vector<1x16x16xf32>
    %cst_6 = arith.constant dense<0.000000e+00> : vector<1x16xf32>
    %13 = vector.multi_reduction <add>, %12, %cst_6 [2] : vector<1x16x16xf32> to vector<1x16xf32>
    %14 = arith.addf %13, %5 : vector<1x16xf32>
    %15 = arith.mulf %9, %13 : vector<1x16xf32>
    %cst_7 = arith.constant dense<0.000000e+00> : vector<1xf32>
    %16 = vector.multi_reduction <add>, %15, %cst_7 [1] : vector<1x16xf32> to vector<1xf32>
    %cst_8 = arith.constant 5.000000e-01 : f32
    %17 = vector.broadcast %cst_8 : f32 to vector<1xf32>
    %18 = arith.mulf %17, %16 : vector<1xf32>
    %19 = arith.mulf %5, %9 : vector<1x16xf32>
    %cst_9 = arith.constant dense<0.000000e+00> : vector<1xf32>
    %20 = vector.multi_reduction <add>, %19, %cst_9 [1] : vector<1x16xf32> to vector<1xf32>
    %21 = arith.addf %18, %20 : vector<1xf32>
    %22 = vector.shape_cast %9 : vector<1x16xf32> to vector<1x1x16xf32>
    %c0_10 = arith.constant 0 : index
    %c0_11 = arith.constant 0 : index
    %c0_12 = arith.constant 0 : index
    %23 = vector.load %arg3[%c0_10, %c0_11, %c0_12] : memref<1x3x16xf32, #tpu.memory_space<vmem>>, vector<1x1x16xf32>
    tpu.vector_store %arg3[%c0_10, %c0_11, %c0_12], %22 {strides = array<i32>} : memref<1x3x16xf32, #tpu.memory_space<vmem>>, vector<1x1x16xf32>,
    %24 = vector.shape_cast %14 : vector<1x16xf32> to vector<1x1x16xf32>
    %c0_13 = arith.constant 0 : index
    %c1 = arith.constant 1 : index
    %c0_14 = arith.constant 0 : index
    %25 = vector.load %arg3[%c0_13, %c1, %c0_14] : memref<1x3x16xf32, #tpu.memory_space<vmem>>, vector<1x1x16xf32>
    tpu.vector_store %arg3[%c0_13, %c1, %c0_14], %24 {strides = array<i32>} : memref<1x3x16xf32, #tpu.memory_space<vmem>>, vector<1x1x16xf32>,
    %26 = vector.shape_cast %21 : vector<1xf32> to vector<1x1x1xf32>
    %27 = vector.shape_cast %26 : vector<1x1x1xf32> to vector<1x1x1xf32>
    %28 = vector.broadcast %27 : vector<1x1x1xf32> to vector<1x1x16xf32>
    %c0_15 = arith.constant 0 : index
    %c2 = arith.constant 2 : index
    %c0_16 = arith.constant 0 : index
    %29 = vector.load %arg3[%c0_15, %c2, %c0_16] : memref<1x3x16xf32, #tpu.memory_space<vmem>>, vector<1x1x16xf32>
    tpu.vector_store %arg3[%c0_15, %c2, %c0_16], %28 {strides = array<i32>} : memref<1x3x16xf32, #tpu.memory_space<vmem>>, vector<1x1x16xf32>,
    return
  }
  func.func @transform_0(%arg0: i32) -> (i32, i32, i32) {
    %c0_i32 = arith.constant 0 : i32
    %c0_i32_0 = arith.constant 0 : i32
    %c0_i32_1 = arith.constant 0 : i32
    return %arg0, %c0_i32, %c0_i32_0 : i32, i32, i32
  }
  func.func @transform_1(%arg0: i32) -> (i32, i32, i32) {
    %c0_i32 = arith.constant 0 : i32
    %c0_i32_0 = arith.constant 0 : i32
    %c0_i32_1 = arith.constant 0 : i32
    return %arg0, %c0_i32, %c0_i32_0 : i32, i32, i32
  }
  func.func @transform_2(%arg0: i32) -> (i32, i32, i32) {
    %c0_i32 = arith.constant 0 : i32
    %c0_i32_0 = arith.constant 0 : i32
    %c0_i32_1 = arith.constant 0 : i32
    return %arg0, %c0_i32, %c0_i32_0 : i32, i32, i32
  }
}

</mosaic_0001>

<llo_original>
// kernel: tpu_custom_call.1
$region0: #{tpu_custom_call.1}
  #allocation0 [shape = 'u32[]', space=smem, size = 0x4, offset = 0x4, fixed_abs, tag = 'smem constant byte address 0x4 - core index']
  #allocation1 [shape = 'u32[72,128]{1,0:T(1,128)}', space=vmem, size = 0x9000, scoped, tag = 'internal scratch']
  %s0 = inlined_call_operand.hbm [shape: f32[2,16,16], index: 0, kind: input, shape index: {}]
  %s1 = inlined_call_operand.hbm [shape: f32[2,2,16], index: 1, kind: input, shape index: {}]
  %s2 = inlined_call_operand.vmem [shape: f32[2,3,16], index: 2, kind: output, shape index: {}]
  %s3 = sld [smem:[#allocation0]]
  $region49: #{tpu_custom_call.1} parent=0
    _
  %s5 = ssub.s32 1, %s3
  %s6 = scalar_select 0, %s5, %s3
  $region1: #{tpu_custom_call.1} parent=0
    #allocation2 [shape = 'u8[16384]{0}', space=vmem, size = 0x4000, scoped, tag = 'input window, operand 0']
    #allocation3 [shape = 's32[2]{0}', space=sflag, size = 0x8, scoped, tag = 'scoped memory for tpu_custom_call.1']
    #allocation4 [shape = 'u8[2048]{0}', space=vmem, size = 0x800, scoped, tag = 'input window, operand 1']
    #allocation5 [shape = 's32[2]{0}', space=sflag, size = 0x8, scoped, tag = 'scoped memory for tpu_custom_call.1']
    %7 = vsyncpa [#allocation3], 0
    %s8 = scalar_lea.sflag [#allocation3], 1
    %9 = vsyncpa %s8, 0
    %10 = vsyncpa [#allocation5], 0
    %s11 = scalar_lea.sflag [#allocation5], 1
    %12 = vsyncpa %s11, 0
    loop: start=0, step=1, limit=4
    $region2: #{tpu_custom_call.1} parent=1 // loop_pre_header
      _
    $region3: #{tpu_custom_call.1} parent=1 // loop_header
      %s14 = sphi 0, %s18
      %p15 = scmp.ge.s32.totalorder %s14, 4
      %s24 = sphi 0, %s26
      %s27 = sphi 0, %s24
      %s28 = sphi 0, %s27
      %s44 = sphi 0, %s28
      %s50 = sphi 0, %s52
      %s53 = sphi 0, %s50
      %s54 = sphi 0, %s53
      %s70 = sphi 0, %s54
      %s76 = sphi 0, %s78
      %s79 = sphi 0, %s76
      %s80 = sphi 0, %s79
      %s96 = sphi 0, %s80
    $region4: #{tpu_custom_call.1} parent=1 // loop_header_branch
      %17 = sbr.rel (%p15) target = $region8
    $region5: #{tpu_custom_call.1} parent=1 // loop_body
      %s19 = ssub.s32 %s14, 1
      %s20 = ssub.s32 %s14, 2
      %s21 = sadd.s32 %s14, 1
      %s22 = ssub.s32 %s14, %s21
      %p23 = scmp.eq.s32.totalorder %s22, 0
      %s25 = sadd.s32 %s24, 1
      %s26 = scalar_select %p23, %s24, %s25
      %p29 = pneg %p23
      %p30 = scmp.eq.s32.totalorder %s14, 1
      %p31 = por %p29, %p30
      %p32 = scmp.ne.s32.totalorder %s24, %s27
      %p33 = scmp.eq.s32.totalorder %s14, 0
      %p34 = por %p32, %p33
      %p35 = scmp.ne.s32.totalorder %s24, %s27
      %p36 = scmp.eq.s32.totalorder %s19, 1
      %p37 = por %p35, %p36
      %p38 = scmp.ne.s32.totalorder %s27, %s28
      %p39 = scmp.eq.s32.totalorder %s19, 0
      %p40 = por %p38, %p39
      %p41 = scmp.ne.s32.totalorder %s27, %s28
      %p42 = scmp.eq.s32.totalorder %s20, 1
      %p43 = por %p41, %p42
      %p45 = scmp.ne.s32.totalorder %s28, %s44
      %p46 = scmp.eq.s32.totalorder %s20, 0
      %p47 = por %p45, %p46
      %s48 = ssub.s32 %s14, %s21
      %p49 = scmp.eq.s32.totalorder %s48, 0
      %s51 = sadd.s32 %s50, 1
      %s52 = scalar_select %p49, %s50, %s51
      %p55 = pneg %p49
      %p56 = scmp.eq.s32.totalorder %s14, 1
      %p57 = por %p55, %p56
      %p58 = scmp.ne.s32.totalorder %s50, %s53
      %p59 = scmp.eq.s32.totalorder %s14, 0
      %p60 = por %p58, %p59
      %p61 = scmp.ne.s32.totalorder %s50, %s53
      %p62 = scmp.eq.s32.totalorder %s19, 1
      %p63 = por %p61, %p62
      %p64 = scmp.ne.s32.totalorder %s53, %s54
      %p65 = scmp.eq.s32.totalorder %s19, 0
      %p66 = por %p64, %p65
      %p67 = scmp.ne.s32.totalorder %s53, %s54
      %p68 = scmp.eq.s32.totalorder %s20, 1
      %p69 = por %p67, %p68
      %p71 = scmp.ne.s32.totalorder %s54, %s70
      %p72 = scmp.eq.s32.totalorder %s20, 0
      %p73 = por %p71, %p72
      %s74 = ssub.s32 %s14, %s21
      %p75 = scmp.eq.s32.totalorder %s74, 0
      %s77 = sadd.s32 %s76, 1
      %s78 = scalar_select %p75, %s76, %s77
      %p81 = pneg %p75
      %p82 = scmp.eq.s32.totalorder %s14, 1
      %p83 = por %p81, %p82
      %p84 = scmp.ne.s32.totalorder %s76, %s79
      %p85 = scmp.eq.s32.totalorder %s14, 0
      %p86 = por %p84, %p85
      %p87 = scmp.ne.s32.totalorder %s76, %s79
      %p88 = scmp.eq.s32.totalorder %s19, 1
      %p89 = por %p87, %p88
      %p90 = scmp.ne.s32.totalorder %s79, %s80
      %p91 = scmp.eq.s32.totalorder %s19, 0
      %p92 = por %p90, %p91
      %p93 = scmp.ne.s32.totalorder %s79, %s80
      %p94 = scmp.eq.s32.totalorder %s20, 1
      %p95 = por %p93, %p94
      %p97 = scmp.ne.s32.totalorder %s80, %s96
      %p98 = scmp.eq.s32.totalorder %s20, 0
      %p99 = por %p97, %p98
      %p100 = scmp.le.s32.totalorder 1, %s14
      %p101 = scmp.lt.s32.totalorder %s14, 3
      %p102 = pnand %p100, %p101
      %p103 = pneg %p102
      // Predicated region
      $region9: #{tpu_custom_call.1} parent=5 // pred_check
        _
      $region10: #{tpu_custom_call.1} parent=5 // pred_check_branch
        %105 = sbr.rel (%p102) target = $region12
      $region11: #{tpu_custom_call.1} parent=5 // pred_region
        %s106 = ssub.s32 %s14, 1
      $region12: #{tpu_custom_call.1} parent=5 // pred_fallthru
        _
      %p107 = scmp.lt.s32.totalorder %s14, 2
      // Predicated region
      $region13: #{tpu_custom_call.1} parent=5 // pred_check
        %p108 = pneg %p107
      $region14: #{tpu_custom_call.1} parent=5 // pred_check_branch
        %110 = sbr.rel (%p108) target = $region16
      $region15: #{tpu_custom_call.1} parent=5 // pred_region
        // Predicated region
        $region17: #{tpu_custom_call.1} parent=15 // pred_check
          %p111 = pneg %p34
        $region18: #{tpu_custom_call.1} parent=15 // pred_check_branch
          %113 = sbr.rel (%p111) target = $region20
        $region19: #{tpu_custom_call.1} parent=15 // pred_region
          %s114 = sand.u32 %s24, 1
          %s115 = scalar_lea.sflag [#allocation3], %s114
          %s116 = sand.u32 %s24, 1
          %s117 = smul.addr %s116, 16
          %s118 = scalar_lea.vmem [#allocation2], %s117
          %120 = vsyncadd %s115, 0
          %s121 = smul.addr %s14, 2
          %s122 = smul.addr %s121, 8
          %s123 = scalar_lea.hbm %s0, %s122
          %s124 = sshll.u32 %s123, 4
          %s125 = int_to_ptr.hbm [resolvable:$true] %s124
          %s126 = sshll.u32 %s118, 4
          %s127 = int_to_ptr.vmem [resolvable:$true] %s126
          %132 = dma.hbm_to_vmem [thread:$0]  %s125, 256, %s127, %s115, 128, 128, 8
        $region20: #{tpu_custom_call.1} parent=15 // pred_fallthru
          _
        // Predicated region
        $region21: #{tpu_custom_call.1} parent=15 // pred_check
          %p133 = pneg %p60
        $region22: #{tpu_custom_call.1} parent=15 // pred_check_branch
          %135 = sbr.rel (%p133) target = $region24
        $region23: #{tpu_custom_call.1} parent=15 // pred_region
          %s136 = sand.u32 %s50, 1
          %s137 = scalar_lea.sflag [#allocation5], %s136
          %s138 = sand.u32 %s50, 1
          %s139 = smul.addr %s138, 2
          %s140 = scalar_lea.vmem [#allocation4], %s139
          %142 = vsyncadd %s137, 0
          %s143 = smul.addr %s14, 2
          %s144 = scalar_lea.hbm %s1, %s143
          %s146 = sshll.u32 %s144, 4
          %s147 = int_to_ptr.hbm [resolvable:$true] %s146
          %s148 = sshll.u32 %s140, 4
          %s149 = int_to_ptr.vmem [resolvable:$true] %s148
          %151 = dma.hbm_to_vmem [thread:$0]  %s147, 32, %s149, %s137
        $region24: #{tpu_custom_call.1} parent=15 // pred_fallthru
          _
      $region16: #{tpu_custom_call.1} parent=5 // pred_fallthru
        _
      %p152 = scmp.le.s32.totalorder 1, %s14
      %p153 = scmp.lt.s32.totalorder %s14, 3
      %p154 = pnand %p152, %p153
      %p155 = pneg %p154
      // Predicated region
      $region25: #{tpu_custom_call.1} parent=5 // pred_check
        _
      $region26: #{tpu_custom_call.1} parent=5 // pred_check_branch
        %157 = sbr.rel (%p154) target = $region28
      $region27: #{tpu_custom_call.1} parent=5 // pred_region
        %s158 = ssub.s32 %s14, 1
        %s159 = sand.u32 %s27, 1
        %s160 = scalar_lea.sflag [#allocation3], %s159
        %s161 = sand.u32 %s27, 1
        %s162 = smul.addr %s161, 16
        %s163 = scalar_lea.vmem [#allocation2], %s162
        // Predicated region
        $region29: #{tpu_custom_call.1} parent=27 // pred_check
          %p164 = pneg %p40
        $region30: #{tpu_custom_call.1} parent=27 // pred_check_branch
          %166 = sbr.rel (%p164) target = $region32
        $region31: #{tpu_custom_call.1} parent=27 // pred_region
          %168 = dma.done %s160, 256
        $region32: #{tpu_custom_call.1} parent=27 // pred_fallthru
          _
        %s169 = sand.u32 %s53, 1
        %s170 = scalar_lea.sflag [#allocation5], %s169
        %s171 = sand.u32 %s53, 1
        %s172 = smul.addr %s171, 2
        %s173 = scalar_lea.vmem [#allocation4], %s172
        // Predicated region
        $region33: #{tpu_custom_call.1} parent=27 // pred_check
          %p174 = pneg %p66
        $region34: #{tpu_custom_call.1} parent=27 // pred_check_branch
          %176 = sbr.rel (%p174) target = $region36
        $region35: #{tpu_custom_call.1} parent=27 // pred_region
          %178 = dma.done %s170, 32
        $region36: #{tpu_custom_call.1} parent=27 // pred_fallthru
          _
        %s179 = sand.u32 %s27, 1
        %s180 = scalar_lea.sflag [#allocation3], %s179
        %s181 = sand.u32 %s27, 1
        %s182 = smul.addr %s181, 16
        %s183 = scalar_lea.vmem [#allocation2], %s182
        %p184 = pneg %p40
        %p185 = pneg %p37
        %s186 = sand.u32 %s53, 1
        %s187 = scalar_lea.sflag [#allocation5], %s186
        %s188 = sand.u32 %s53, 1
        %s189 = smul.addr %s188, 2
        %s190 = scalar_lea.vmem [#allocation4], %s189
        %p191 = pneg %p66
        %p192 = pneg %p63
        %p193 = pneg %p92
        %p194 = pneg %p89
        %p195 = scmp.lt.s32.totalorder %s19, 1
        %s196 = scalar_select %p195, %s19, 1
        %s197 = smul.addr %s196, 4
        %s198 = scalar_lea.vmem %s2, %s197
        %p199 = scmp.lt.s32.totalorder %s19, 1
        %s200 = scalar_select %p199, %s19, 1
        %s201 = smul.addr %s200, 4
        %s202 = scalar_lea.vmem %s2, %s201
        %v203 = vld [vmem:[%s163] sm:$0xff]
        %v204 = vld [vmem:[%s163 + $0x8] sm:$0xff]
        %v205 = vld [vmem:[%s173] sm:$0x3]
        %v206 = vmax.f32 %v205, -10000.0
        %v207 = vmin.f32 %v206, 10000.0
        %v208 = vperm.slane %v207, 0
        %v209 = vmul.f32 %v203, %v208
        %v210 = vmul.f32 %v204, %v208
        %vm211 = vcmask 130048
        %v212 = vsel %vm211, %v209, 0.0
        %213 = vadd.xlane.f32.xlu0 %v212
        %v214 = vpop.xlane.xlu0 %213
        %v215 = vsel %vm211, %v210, 0.0
        %216 = vadd.xlane.f32.xlu0 %v215
        %v217 = vpop.xlane.xlu0 %216
        %v219 = vperm.slane %v205, 1
        %v220 = vlaneseq
        %v221 = vshrl.u32 %v220, 7
        %223 = vset.pattern.permute.xlu0 %v221
        %224 = vperm.xlu0 %223, %v219
        %v225 = vpop.permute.xlu0 %224
        %v226 = vlaneseq
        %v227 = vshrl.u32 %v226, 7
        %v228 = vadd.s32 %v227, 8
        %229 = vset.pattern.permute.xlu0 %v228
        %230 = vperm.xlu0 %229, %v219
        %v231 = vpop.permute.xlu0 %230
        %v234 = vadd.f32 %v214, %v225
        %v235 = vadd.f32 %v217, %v231
        %v238 = vlaneseq
        %v239 = vand.u32 %v238, 127
        %v240 = vperm.slane %v214, %v239
        %v241 = vadd.s32 %v239, 4294967288
        %v242 = vperm.slane %v217, %v241
        %vm243 = vcmask 130112
        %v244 = vsel %vm243, %v242, %v240
        %v246 = vmul.f32 %v207, %v244
        %vm247 = vcmask 122880
        %v248 = vsel %vm247, %v246, 0.0
        %249 = vadd.xlane.f32.xlu0 %v248
        %v250 = vpop.xlane.xlu0 %249
        %v251 = vmul.f32 %v250, 0.5
        %v253 = vrot.slane %v207, 7
        %v255 = vmul.f32 %v205, %v253
        %vm256 = vcmask 123905
        %v257 = vsel %vm256, %v255, 0.0
        %258 = vadd.xlane.f32.xlu0 %v257
        %v259 = vpop.xlane.xlu0 %258
        %v261 = vrot.slane %v259, 1
        %v263 = vadd.f32 %v251, %v261
        %264 = vst.msk [vmem:[%s202] sm:$0x1] %vm247, %v207
        %267 = vset.pattern.permute.xlu0 0
        %268 = vperm.xlu0 %267, %v234
        %v269 = vpop.permute.xlu0 %268
        %270 = vset.pattern.permute.xlu0 0
        %271 = vperm.xlu0 %270, %v235
        %v272 = vpop.permute.xlu0 %271
        %v273 = vperm.slane %v269, %v239
        %v274 = vperm.slane %v272, %v241
        %v275 = vsel %vm243, %v274, %v273
        %277 = vst.msk [vmem:[%s202 + $0x1] sm:$0x1] %vm247, %v275
        %279 = vset.pattern.permute.xlu0 0
        %280 = vperm.xlu0 %279, %v263
        %v281 = vpop.permute.xlu0 %280
        %283 = vst.msk [vmem:[%s202 + $0x2] sm:$0x1] %vm247, %v281
        %p284 = scmp.lt.s32.totalorder %s19, 1
        %s285 = scalar_select %p284, %s19, 1
        %s286 = smul.addr %s285, 4
        %s287 = scalar_lea.vmem %s2, %s286
        // Predicated region
        $region37: #{tpu_custom_call.1} parent=27 // pred_check
          %p288 = pneg %p89
        $region38: #{tpu_custom_call.1} parent=27 // pred_check_branch
          %290 = sbr.rel (%p288) target = $region40
        $region39: #{tpu_custom_call.1} parent=27 // pred_region
          _
        $region40: #{tpu_custom_call.1} parent=27 // pred_fallthru
          _
      $region28: #{tpu_custom_call.1} parent=5 // pred_fallthru
        _
      %p291 = scmp.le.s32.totalorder 2, %s14
      // Predicated region
      $region41: #{tpu_custom_call.1} parent=5 // pred_check
        %p292 = pneg %p291
      $region42: #{tpu_custom_call.1} parent=5 // pred_check_branch
        %294 = sbr.rel (%p292) target = $region44
      $region43: #{tpu_custom_call.1} parent=5 // pred_region
        %s295 = ssub.s32 %s14, 2
        // Predicated region
        $region45: #{tpu_custom_call.1} parent=43 // pred_check
          %p296 = pneg %p95
        $region46: #{tpu_custom_call.1} parent=43 // pred_check_branch
          %298 = sbr.rel (%p296) target = $region48
        $region47: #{tpu_custom_call.1} parent=43 // pred_region
          %p299 = scmp.lt.s32.totalorder %s20, 1
          %s300 = scalar_select %p299, %s20, 1
          %s301 = smul.addr %s300, 4
          %s302 = scalar_lea.vmem %s2, %s301
        $region48: #{tpu_custom_call.1} parent=43 // pred_fallthru
          _
      $region44: #{tpu_custom_call.1} parent=5 // pred_fallthru
        _
    $region6: #{tpu_custom_call.1} parent=1 // loop_footer
      %s18 = sadd.s32 1, %s14
    $region7: #{tpu_custom_call.1} parent=1 // loop_footer_branch
      %13 = sbr.rel target = $region3
    $region8: #{tpu_custom_call.1} parent=1 // loop_exit
      _
    %303 = vsyncpa [#allocation3], 1
    %s304 = scalar_lea.sflag [#allocation3], 1
    %305 = vsyncpa %s304, 1
    %306 = vsyncpa [#allocation5], 1
    %s307 = scalar_lea.sflag [#allocation5], 1
    %308 = vsyncpa %s307, 1

</llo_original>
